<compile_context>
chip_gen: v6e
topology: v6e:2x2x1
jax: 0.10.0
libtpu: 0.0.40
codegen_flags: <defaults>
</compile_context>

<pallas_src>
import functools

import jax
import jax.numpy as jnp
from jax.experimental import pallas as pl
from jax.experimental.pallas import tpu as pltpu

EPS = 1e-5          # nn.BatchNorm2d default eps
LANE = 128          # TPU lane width / MXU alignment
DEFAULT_TM = 256    # rows per tile (multiple of 128)


def _round_up(x, m):
    return (x + m - 1) // m * m


def _pad2(a, rows, cols):
    return jnp.pad(a, ((0, rows - a.shape[0]), (0, cols - a.shape[1])))


# ---------------------------------------------------------------------------
# JAX glue: im2col / weight layout (pure indexing + reshapes).
# ---------------------------------------------------------------------------
def _im2col(x_nhwc, k, stride, pad):
    """Return (patches (N*Ho*Wo, k*k*C), (N, Ho, Wo))."""
    xp = jnp.pad(x_nhwc, ((0, 0), (pad, pad), (pad, pad), (0, 0)))
    N, Hp, Wp, C = xp.shape
    Ho = (Hp - k) // stride + 1
    Wo = (Wp - k) // stride + 1
    cols = []
    for i in range(k):
        for j in range(k):
            cols.append(xp[:, i:i + stride * (Ho - 1) + 1:stride,
                            j:j + stride * (Wo - 1) + 1:stride, :])
    patches = jnp.concatenate(cols, axis=-1)              # (N, Ho, Wo, k*k*C)
    return patches.reshape(N * Ho * Wo, k * k * C), (N, Ho, Wo)


def _w_to_mat(w_oihw):
    """PyTorch (O, I, kh, kw) conv weight -> (kh*kw*I, O) GEMM weight."""
    O, I, kh, kw = w_oihw.shape
    return jnp.transpose(w_oihw, (2, 3, 1, 0)).reshape(kh * kw * I, O)


# ---------------------------------------------------------------------------
# Pallas kernels
# ---------------------------------------------------------------------------
def _write_stats(val, su_ref, sq_ref):
    """Per-tile BN partial sums (broadcast across 8 sublanes for full stores)."""
    c = val.shape[1]
    su_ref[...] = jnp.broadcast_to(jnp.sum(val, axis=0, keepdims=True), (8, c))
    sq_ref[...] = jnp.broadcast_to(
        jnp.sum(val * val, axis=0, keepdims=True), (8, c))


def _conv_stats_kernel(p_ref, w_ref, y_ref, su_ref, sq_ref):
    """conv as GEMM (bf16 operands, f32 accumulate) + BN partial sums."""
    y = jnp.dot(p_ref[...], w_ref[...], preferred_element_type=jnp.float32)
    y_ref[...] = y
    _write_stats(y, su_ref, sq_ref)


def _conv_add_stats_kernel(p_ref, w_ref, r_ref, s_ref, su_ref, sq_ref):
    """conv GEMM + identity residual add (f32) + BN partial sums."""
    s = jnp.dot(p_ref[...], w_ref[...],
                preferred_element_type=jnp.float32) + r_ref[...]
    s_ref[...] = s
    _write_stats(s, su_ref, sq_ref)


def _conv_proj_stats_kernel(p_ref, w_ref, x_ref, wp_ref, s_ref, su_ref, sq_ref):
    """conv GEMM + 1x1-projection GEMM residual + BN partial sums."""
    s = (jnp.dot(p_ref[...], w_ref[...], preferred_element_type=jnp.float32)
         + jnp.dot(x_ref[...], wp_ref[...], preferred_element_type=jnp.float32))
    s_ref[...] = s
    _write_stats(s, su_ref, sq_ref)


def _norm_relu_kernel(y_ref, sc_ref, sh_ref, o_ref):
    """Fused BN normalize (folded scale/shift) + ReLU: one FMA + max."""
    o_ref[...] = jnp.maximum(
        y_ref[...] * sc_ref[...] + sh_ref[...], 0.0).astype(o_ref.dtype)


# ---------------------------------------------------------------------------
# pallas_call wrappers
# ---------------------------------------------------------------------------
def _mosaic_params():
    return pltpu.CompilerParams(
        dimension_semantics=("parallel",),      # row tiles are independent
        vmem_limit_bytes=32 * 1024 * 1024)


def _conv_stage(kernel, operands, row_tiled, tm, c_pad):
    """Tiled GEMM stage -> (raw pre-BN activation, per-tile sum, sumsq)."""
    m_pad = operands[0].shape[0]
    nt = m_pad // tm
    in_specs = []
    for a, tiled in zip(operands, row_tiled):
        if tiled:   # row-tiled operand: new (tm, K) block per grid step
            in_specs.append(pl.BlockSpec((tm, a.shape[1]), lambda i: (i, 0)))
        else:       # resident operand (weights): same block every step
            in_specs.append(pl.BlockSpec(a.shape, lambda i: (0, 0)))
    out_shape = (jax.ShapeDtypeStruct((m_pad, c_pad), jnp.float32),
                 jax.ShapeDtypeStruct((nt * 8, c_pad), jnp.float32),
                 jax.ShapeDtypeStruct((nt * 8, c_pad), jnp.float32))
    out_specs = (pl.BlockSpec((tm, c_pad), lambda i: (i, 0)),
                 pl.BlockSpec((8, c_pad), lambda i: (i, 0)),
                 pl.BlockSpec((8, c_pad), lambda i: (i, 0)))
    return pl.pallas_call(
        kernel,
        out_shape=out_shape,
        grid_spec=pltpu.PrefetchScalarGridSpec(
            num_scalar_prefetch=0, grid=(nt,),
            in_specs=in_specs, out_specs=out_specs),
        compiler_params=_mosaic_params(),
    )(*operands)


def _norm_relu(y, scale, shift, tm, out_dtype):
    m_pad, c_pad = y.shape
    nt = m_pad // tm
    return pl.pallas_call(
        _norm_relu_kernel,
        out_shape=jax.ShapeDtypeStruct((m_pad, c_pad), out_dtype),
        grid_spec=pltpu.PrefetchScalarGridSpec(
            num_scalar_prefetch=0, grid=(nt,),
            in_specs=[pl.BlockSpec((tm, c_pad), lambda i: (i, 0)),
                      pl.BlockSpec((1, c_pad), lambda i: (0, 0)),
                      pl.BlockSpec((1, c_pad), lambda i: (0, 0))],
            out_specs=pl.BlockSpec((tm, c_pad), lambda i: (i, 0))),
        compiler_params=_mosaic_params(),
    )(y, scale, shift)


def _bn_scale_shift(su, sq, m_valid, gamma, beta, c_pad, out_c):
    """Fold global batch stats + gamma/beta into per-channel (scale, shift)."""
    ssum = su[0::8, :].sum(axis=0)      # sublane rows are broadcast copies
    ssq = sq[0::8, :].sum(axis=0)
    mean = ssum / m_valid               # padded rows contributed exact zeros
    var = jnp.maximum(ssq / m_valid - mean * mean, 0.0)
    g = jnp.pad(gamma, (0, c_pad - out_c))
    b = jnp.pad(beta, (0, c_pad - out_c))
    scale = g * jax.lax.rsqrt(var + EPS)
    shift = b - mean * scale
    return scale.reshape(1, -1), shift.reshape(1, -1)


# ---------------------------------------------------------------------------
# Parameters (deterministic, synthetic) and forward
# ---------------------------------------------------------------------------
def init_params(key, in_c, out_c):
    ks = jax.random.split(key, 6)
    return {
        "w1": jax.random.normal(ks[0], (out_c, in_c, 3, 3), jnp.float32) * 0.1,
        "b1": jax.random.normal(ks[1], (out_c,), jnp.float32) * 0.1,
        "w2": jax.random.normal(ks[2], (out_c, out_c, 3, 3), jnp.float32) * 0.1,
        "b2": jax.random.normal(ks[3], (out_c,), jnp.float32) * 0.1,
        "wp": jax.random.normal(ks[4], (out_c, in_c, 1, 1), jnp.float32) * 0.1,
        "bp": jax.random.normal(ks[5], (out_c,), jnp.float32) * 0.1,
        "g1": jnp.linspace(0.8, 1.2, out_c).astype(jnp.float32),
        "be1": jnp.linspace(-0.1, 0.1, out_c).astype(jnp.float32),
        "g2": jnp.linspace(1.2, 0.8, out_c).astype(jnp.float32),
        "be2": jnp.linspace(0.1, -0.1, out_c).astype(jnp.float32),
    }


def basic_block_forward(x_nchw, params, in_c, out_c, stride=1, *,
                        tm=DEFAULT_TM, mxu_dtype=jnp.bfloat16):
    """NCHW in / NCHW out (PyTorch convention); NHWC + tiled im2col GEMMs."""
    assert tm % LANE == 0
    x = jnp.transpose(x_nchw, (0, 2, 3, 1)).astype(jnp.float32)   # NHWC
    N, H, W, _ = x.shape
    c_pad = _round_up(out_c, LANE)

    # ------------- stage 1: conv3x3(stride) -> BN1 -> ReLU -----------------
    p1, (_, Ho, Wo) = _im2col(x, 3, stride, 1)          # (M, 9*in_c)
    M = N * Ho * Wo
    tm_eff = min(tm, _round_up(M, LANE))                # multiple of 128
    m_pad = _round_up(M, tm_eff)
    k1_pad = _round_up(9 * in_c, LANE)

    p1p = _pad2(p1, m_pad, k1_pad).astype(mxu_dtype)
    w1m = _pad2(_w_to_mat(params["w1"]), k1_pad, c_pad).astype(mxu_dtype)
    # conv bias b1 omitted: exactly cancelled by BN1's batch-mean subtraction.

    y1, su1, sq1 = _conv_stage(_conv_stats_kernel, (p1p, w1m),
                               (True, False), tm_eff, c_pad)
    sc1, sh1 = _bn_scale_shift(su1, sq1, float(M), params["g1"], params["be1"],
                               c_pad, out_c)
    y1n = _norm_relu(y1, sc1, sh1, tm_eff, mxu_dtype)   # MXU dtype for conv2

    # ------------- stage 2: conv3x3(s=1) + residual -> BN2 -> ReLU ---------
    y1n_nhwc = y1n[:M, :out_c].reshape(N, Ho, Wo, out_c)
    p2, _ = _im2col(y1n_nhwc, 3, 1, 1)                  # (M, 9*out_c)
    k2_pad = _round_up(9 * out_c, LANE)
    p2p = _pad2(p2, m_pad, k2_pad).astype(mxu_dtype)
    w2m = _pad2(_w_to_mat(params["w2"]), k2_pad, c_pad).astype(mxu_dtype)
    # conv biases b2 / bp omitted: cancelled by BN2's batch-mean subtraction.

    if in_c != out_c:
        kp_pad = _round_up(in_c, LANE)
        xs = x[:, ::stride, ::stride, :].reshape(M, in_c)
        xsp = _pad2(xs, m_pad, kp_pad).astype(mxu_dtype)
        wpm = _pad2(_w_to_mat(params["wp"]), kp_pad, c_pad).astype(mxu_dtype)
        s, su2, sq2 = _conv_stage(_conv_proj_stats_kernel,
                                  (p2p, w2m, xsp, wpm),
                                  (True, False, True, False), tm_eff, c_pad)
    else:
        # identity residual (stride == 1); added in f32 inside the kernel.
        xr = _pad2(x.reshape(N * H * W, in_c), m_pad, c_pad)
        s, su2, sq2 = _conv_stage(_conv_add_stats_kernel,
                                  (p2p, w2m, xr),
                                  (True, False, True), tm_eff, c_pad)

    sc2, sh2 = _bn_scale_shift(su2, sq2, float(M), params["g2"], params["be2"],
                               c_pad, out_c)
    out = _norm_relu(s, sc2, sh2, tm_eff, jnp.float32)
    out = out[:M, :out_c].reshape(N, Ho, Wo, out_c)
    return jnp.transpose(out, (0, 3, 1, 2))             # back to NCHW


# ---------------------------------------------------------------------------
# Pure-JAX reference (keeps the conv biases; used for correctness check only)
# ---------------------------------------------------------------------------
def reference_forward(x, p, in_c, out_c, stride):
    def conv(x, w, b, s, pad):
        y = jax.lax.conv_general_dilated(
            x, w, (s, s), ((pad, pad), (pad, pad)),
            dimension_numbers=("NCHW", "OIHW", "NCHW"))
        return y + b.reshape(1, -1, 1, 1)

    def bn(x, g, be):
        mean = jnp.mean(x, axis=(0, 2, 3), keepdims=True)
        var = jnp.mean((x - mean) ** 2, axis=(0, 2, 3), keepdims=True)
        return ((x - mean) * jax.lax.rsqrt(var + EPS)
                * g.reshape(1, -1, 1, 1) + be.reshape(1, -1, 1, 1))

    y = jnp.maximum(bn(conv(x, p["w1"], p["b1"], stride, 1),
                       p["g1"], p["be1"]), 0.0)
    fx = conv(y, p["w2"], p["b2"], 1, 1)
    r = x if in_c == out_c else conv(x, p["wp"], p["bp"], stride, 0)
    return jnp.maximum(bn(r + fx, p["g2"], p["be2"]), 0.0)


if __name__ == "__main__":
    key = jax.random.PRNGKey(0)
    kx, kp1, kp2 = jax.random.split(key, 3)
    x = jax.random.normal(kx, (2, 4, 16, 16), jnp.float32)    # NCHW

    cases = [
        # (in_c, out_c, stride, expected shape, param key)
        (4, 8, 2, (2, 8, 8, 8), kp1),     # projection path
        (4, 4, 1, (2, 4, 16, 16), kp2),   # identity path (2 row tiles -> BN
                                          # cross-tile statistics exercised)
    ]
    for in_c, out_c, stride, expected, pkey in cases:
        params = init_params(pkey, in_c, out_c)
        ref = reference_forward(x, params, in_c, out_c, stride)

        # f32 MXU path: tight check of tiling / global BN stats / fusion.
        f32_fwd = jax.jit(functools.partial(
            basic_block_forward, in_c=in_c, out_c=out_c, stride=stride,
            mxu_dtype=jnp.float32))
        out_f32 = jax.block_until_ready(f32_fwd(x, params))
        assert out_f32.shape == expected
        assert jnp.allclose(out_f32, ref, atol=1e-3, rtol=1e-3)

        # bf16 MXU operands (default perf config): looser tol vs f32 ref.
        bf16_fwd = jax.jit(functools.partial(
            basic_block_forward, in_c=in_c, out_c=out_c, stride=stride))
        out_bf16 = jax.block_until_ready(bf16_fwd(x, params))
        assert out_bf16.shape == expected
        assert jnp.allclose(out_bf16, ref, atol=5e-2, rtol=5e-2)

    print("KERNEL_OK")
</pallas_src>

<mosaic_0001>
module attributes {stable_mosaic.version = 11 : i64} {
  func.func @_norm_relu_kernel(%arg0: i32, %arg1: memref<128x128xf32, #tpu.memory_space<vmem>>, %arg2: memref<1x128xf32, #tpu.memory_space<vmem>>, %arg3: memref<1x128xf32, #tpu.memory_space<vmem>>, %arg4: memref<128x128xf32, #tpu.memory_space<vmem>>) attributes {dimension_semantics = [#tpu.dimension_semantics<parallel>], iteration_bounds = array<i64: 1>, scalar_prefetch = 0 : i64, scratch_operands = 0 : i64, tpu.core_type = #tpu.core_type<tc>, window_params = [{transform_indices = @transform_0, window_bounds = array<i64: 128, 128>}, {pipeline_mode = #tpu.pipeline_mode<synchronous>, transform_indices = @transform_1, window_bounds = array<i64: 1, 128>}, {pipeline_mode = #tpu.pipeline_mode<synchronous>, transform_indices = @transform_2, window_bounds = array<i64: 1, 128>}, {transform_indices = @transform_3, window_bounds = array<i64: 128, 128>}]} {
    %c0 = arith.constant 0 : index
    %c0_0 = arith.constant 0 : index
    %0 = vector.load %arg1[%c0, %c0_0] : memref<128x128xf32, #tpu.memory_space<vmem>>, vector<128x128xf32>
    %c0_1 = arith.constant 0 : index
    %c0_2 = arith.constant 0 : index
    %1 = vector.load %arg2[%c0_1, %c0_2] : memref<1x128xf32, #tpu.memory_space<vmem>>, vector<1x128xf32>
    %2 = vector.broadcast %1 : vector<1x128xf32> to vector<128x128xf32>
    %3 = arith.mulf %0, %2 : vector<128x128xf32>
    %c0_3 = arith.constant 0 : index
    %c0_4 = arith.constant 0 : index
    %4 = vector.load %arg3[%c0_3, %c0_4] : memref<1x128xf32, #tpu.memory_space<vmem>>, vector<1x128xf32>
    %5 = vector.broadcast %4 : vector<1x128xf32> to vector<128x128xf32>
    %6 = arith.addf %3, %5 : vector<128x128xf32>
    %cst = arith.constant 0.000000e+00 : f32
    %7 = vector.broadcast %cst : f32 to vector<128x128xf32>
    %8 = arith.maximumf %6, %7 : vector<128x128xf32>
    %c0_5 = arith.constant 0 : index
    %c0_6 = arith.constant 0 : index
    %9 = vector.load %arg4[%c0_5, %c0_6] : memref<128x128xf32, #tpu.memory_space<vmem>>, vector<128x128xf32>
    tpu.vector_store %arg4[%c0_5, %c0_6], %8 {strides = array<i32>} : memref<128x128xf32, #tpu.memory_space<vmem>>, vector<128x128xf32>,
    return
  }
  func.func @transform_0(%arg0: i32) -> (i32, i32) {
    %c0_i32 = arith.constant 0 : i32
    %c0_i32_0 = arith.constant 0 : i32
    return %arg0, %c0_i32 : i32, i32
  }
  func.func @transform_1(%arg0: i32) -> (i32, i32) {
    %c0_i32 = arith.constant 0 : i32
    %c0_i32_0 = arith.constant 0 : i32
    %c0_i32_1 = arith.constant 0 : i32
    return %c0_i32, %c0_i32_0 : i32, i32
  }
  func.func @transform_2(%arg0: i32) -> (i32, i32) {
    %c0_i32 = arith.constant 0 : i32
    %c0_i32_0 = arith.constant 0 : i32
    %c0_i32_1 = arith.constant 0 : i32
    return %c0_i32, %c0_i32_0 : i32, i32
  }
  func.func @transform_3(%arg0: i32) -> (i32, i32) {
    %c0_i32 = arith.constant 0 : i32
    %c0_i32_0 = arith.constant 0 : i32
    return %arg0, %c0_i32 : i32, i32
  }
}

module attributes {stable_mosaic.version = 11 : i64} {
  func.func @_conv_stats_kernel(%arg0: i32, %arg1: memref<128x128xf32, #tpu.memory_space<vmem>>, %arg2: memref<128x128xf32, #tpu.memory_space<vmem>>, %arg3: memref<128x128xf32, #tpu.memory_space<vmem>>, %arg4: memref<8x128xf32, #tpu.memory_space<vmem>>, %arg5: memref<8x128xf32, #tpu.memory_space<vmem>>) attributes {dimension_semantics = [#tpu.dimension_semantics<parallel>], iteration_bounds = array<i64: 1>, scalar_prefetch = 0 : i64, scratch_operands = 0 : i64, tpu.core_type = #tpu.core_type<tc>, window_params = [{transform_indices = @transform_0, window_bounds = array<i64: 128, 128>}, {pipeline_mode = #tpu.pipeline_mode<synchronous>, transform_indices = @transform_1, window_bounds = array<i64: 128, 128>}, {transform_indices = @transform_2, window_bounds = array<i64: 128, 128>}, {transform_indices = @transform_3, window_bounds = array<i64: 8, 128>}, {transform_indices = @transform_4, window_bounds = array<i64: 8, 128>}]} {
    %c0 = arith.constant 0 : index
    %c0_0 = arith.constant 0 : index
    %0 = vector.load %arg1[%c0, %c0_0] : memref<128x128xf32, #tpu.memory_space<vmem>>, vector<128x128xf32>
    %c0_1 = arith.constant 0 : index
    %c0_2 = arith.constant 0 : index
    %1 = vector.load %arg2[%c0_1, %c0_2] : memref<128x128xf32, #tpu.memory_space<vmem>>, vector<128x128xf32>
    %cst = arith.constant dense<0.000000e+00> : vector<128x128xf32>
    %2 = tpu.matmul %0, %1, %cst {dimension_numbers = #tpu.dot_dimension_numbers<[1], [0], [0], [1], [0, 0, 1, 1], [], []>} : vector<128x128xf32>, vector<128x128xf32>, vector<128x128xf32> -> vector<128x128xf32>
    %c0_3 = arith.constant 0 : index
    %c0_4 = arith.constant 0 : index
    %3 = vector.load %arg3[%c0_3, %c0_4] : memref<128x128xf32, #tpu.memory_space<vmem>>, vector<128x128xf32>
    tpu.vector_store %arg3[%c0_3, %c0_4], %2 {strides = array<i32>} : memref<128x128xf32, #tpu.memory_space<vmem>>, vector<128x128xf32>,
    %cst_5 = arith.constant dense<0.000000e+00> : vector<128xf32>
    %4 = vector.multi_reduction <add>, %2, %cst_5 [0] : vector<128x128xf32> to vector<128xf32>
    %5 = vector.shape_cast %4 : vector<128xf32> to vector<1x128xf32>
    %6 = vector.shape_cast %5 : vector<1x128xf32> to vector<1x128xf32>
    %7 = vector.broadcast %6 : vector<1x128xf32> to vector<8x128xf32>
    %c0_6 = arith.constant 0 : index
    %c0_7 = arith.constant 0 : index
    %8 = vector.load %arg4[%c0_6, %c0_7] : memref<8x128xf32, #tpu.memory_space<vmem>>, vector<8x128xf32>
    tpu.vector_store %arg4[%c0_6, %c0_7], %7 {strides = array<i32>} : memref<8x128xf32, #tpu.memory_space<vmem>>, vector<8x128xf32>,
    %9 = arith.mulf %2, %2 : vector<128x128xf32>
    %cst_8 = arith.constant dense<0.000000e+00> : vector<128xf32>
    %10 = vector.multi_reduction <add>, %9, %cst_8 [0] : vector<128x128xf32> to vector<128xf32>
    %11 = vector.shape_cast %10 : vector<128xf32> to vector<1x128xf32>
    %12 = vector.shape_cast %11 : vector<1x128xf32> to vector<1x128xf32>
    %13 = vector.broadcast %12 : vector<1x128xf32> to vector<8x128xf32>
    %c0_9 = arith.constant 0 : index
    %c0_10 = arith.constant 0 : index
    %14 = vector.load %arg5[%c0_9, %c0_10] : memref<8x128xf32, #tpu.memory_space<vmem>>, vector<8x128xf32>
    tpu.vector_store %arg5[%c0_9, %c0_10], %13 {strides = array<i32>} : memref<8x128xf32, #tpu.memory_space<vmem>>, vector<8x128xf32>,
    return
  }
  func.func @transform_0(%arg0: i32) -> (i32, i32) {
    %c0_i32 = arith.constant 0 : i32
    %c0_i32_0 = arith.constant 0 : i32
    return %arg0, %c0_i32 : i32, i32
  }
  func.func @transform_1(%arg0: i32) -> (i32, i32) {
    %c0_i32 = arith.constant 0 : i32
    %c0_i32_0 = arith.constant 0 : i32
    %c0_i32_1 = arith.constant 0 : i32
    return %c0_i32, %c0_i32_0 : i32, i32
  }
  func.func @transform_2(%arg0: i32) -> (i32, i32) {
    %c0_i32 = arith.constant 0 : i32
    %c0_i32_0 = arith.constant 0 : i32
    return %arg0, %c0_i32 : i32, i32
  }
  func.func @transform_3(%arg0: i32) -> (i32, i32) {
    %c0_i32 = arith.constant 0 : i32
    %c0_i32_0 = arith.constant 0 : i32
    return %arg0, %c0_i32 : i32, i32
  }
  func.func @transform_4(%arg0: i32) -> (i32, i32) {
    %c0_i32 = arith.constant 0 : i32
    %c0_i32_0 = arith.constant 0 : i32
    return %arg0, %c0_i32 : i32, i32
  }
}

module attributes {stable_mosaic.version = 11 : i64} {
  func.func @_conv_proj_stats_kernel(%arg0: i32, %arg1: memref<128x128xf32, #tpu.memory_space<vmem>>, %arg2: memref<128x128xf32, #tpu.memory_space<vmem>>, %arg3: memref<128x128xf32, #tpu.memory_space<vmem>>, %arg4: memref<128x128xf32, #tpu.memory_space<vmem>>, %arg5: memref<128x128xf32, #tpu.memory_space<vmem>>, %arg6: memref<8x128xf32, #tpu.memory_space<vmem>>, %arg7: memref<8x128xf32, #tpu.memory_space<vmem>>) attributes {dimension_semantics = [#tpu.dimension_semantics<parallel>], iteration_bounds = array<i64: 1>, scalar_prefetch = 0 : i64, scratch_operands = 0 : i64, tpu.core_type = #tpu.core_type<tc>, window_params = [{transform_indices = @transform_0, window_bounds = array<i64: 128, 128>}, {pipeline_mode = #tpu.pipeline_mode<synchronous>, transform_indices = @transform_1, window_bounds = array<i64: 128, 128>}, {transform_indices = @transform_2, window_bounds = array<i64: 128, 128>}, {pipeline_mode = #tpu.pipeline_mode<synchronous>, transform_indices = @transform_3, window_bounds = array<i64: 128, 128>}, {transform_indices = @transform_4, window_bounds = array<i64: 128, 128>}, {transform_indices = @transform_5, window_bounds = array<i64: 8, 128>}, {transform_indices = @transform_6, window_bounds = array<i64: 8, 128>}]} {
    %c0 = arith.constant 0 : index
    %c0_0 = arith.constant 0 : index
    %0 = vector.load %arg1[%c0, %c0_0] : memref<128x128xf32, #tpu.memory_space<vmem>>, vector<128x128xf32>
    %c0_1 = arith.constant 0 : index
    %c0_2 = arith.constant 0 : index
    %1 = vector.load %arg2[%c0_1, %c0_2] : memref<128x128xf32, #tpu.memory_space<vmem>>, vector<128x128xf32>
    %cst = arith.constant dense<0.000000e+00> : vector<128x128xf32>
    %2 = tpu.matmul %0, %1, %cst {dimension_numbers = #tpu.dot_dimension_numbers<[1], [0], [0], [1], [0, 0, 1, 1], [], []>} : vector<128x128xf32>, vector<128x128xf32>, vector<128x128xf32> -> vector<128x128xf32>
    %c0_3 = arith.constant 0 : index
    %c0_4 = arith.constant 0 : index
    %3 = vector.load %arg3[%c0_3, %c0_4] : memref<128x128xf32, #tpu.memory_space<vmem>>, vector<128x128xf32>
    %c0_5 = arith.constant 0 : index
    %c0_6 = arith.constant 0 : index
    %4 = vector.load %arg4[%c0_5, %c0_6] : memref<128x128xf32, #tpu.memory_space<vmem>>, vector<128x128xf32>
    %cst_7 = arith.constant dense<0.000000e+00> : vector<128x128xf32>
    %5 = tpu.matmul %3, %4, %cst_7 {dimension_numbers = #tpu.dot_dimension_numbers<[1], [0], [0], [1], [0, 0, 1, 1], [], []>} : vector<128x128xf32>, vector<128x128xf32>, vector<128x128xf32> -> vector<128x128xf32>
    %6 = arith.addf %2, %5 : vector<128x128xf32>
    %c0_8 = arith.constant 0 : index
    %c0_9 = arith.constant 0 : index
    %7 = vector.load %arg5[%c0_8, %c0_9] : memref<128x128xf32, #tpu.memory_space<vmem>>, vector<128x128xf32>
    tpu.vector_store %arg5[%c0_8, %c0_9], %6 {strides = array<i32>} : memref<128x128xf32, #tpu.memory_space<vmem>>, vector<128x128xf32>,
    %cst_10 = arith.constant dense<0.000000e+00> : vector<128xf32>
    %8 = vector.multi_reduction <add>, %6, %cst_10 [0] : vector<128x128xf32> to vector<128xf32>
    %9 = vector.shape_cast %8 : vector<128xf32> to vector<1x128xf32>
    %10 = vector.shape_cast %9 : vector<1x128xf32> to vector<1x128xf32>
    %11 = vector.broadcast %10 : vector<1x128xf32> to vector<8x128xf32>
    %c0_11 = arith.constant 0 : index
    %c0_12 = arith.constant 0 : index
    %12 = vector.load %arg6[%c0_11, %c0_12] : memref<8x128xf32, #tpu.memory_space<vmem>>, vector<8x128xf32>
    tpu.vector_store %arg6[%c0_11, %c0_12], %11 {strides = array<i32>} : memref<8x128xf32, #tpu.memory_space<vmem>>, vector<8x128xf32>,
    %13 = arith.mulf %6, %6 : vector<128x128xf32>
    %cst_13 = arith.constant dense<0.000000e+00> : vector<128xf32>
    %14 = vector.multi_reduction <add>, %13, %cst_13 [0] : vector<128x128xf32> to vector<128xf32>
    %15 = vector.shape_cast %14 : vector<128xf32> to vector<1x128xf32>
    %16 = vector.shape_cast %15 : vector<1x128xf32> to vector<1x128xf32>
    %17 = vector.broadcast %16 : vector<1x128xf32> to vector<8x128xf32>
    %c0_14 = arith.constant 0 : index
    %c0_15 = arith.constant 0 : index
    %18 = vector.load %arg7[%c0_14, %c0_15] : memref<8x128xf32, #tpu.memory_space<vmem>>, vector<8x128xf32>
    tpu.vector_store %arg7[%c0_14, %c0_15], %17 {strides = array<i32>} : memref<8x128xf32, #tpu.memory_space<vmem>>, vector<8x128xf32>,
    return
  }
  func.func @transform_0(%arg0: i32) -> (i32, i32) {
    %c0_i32 = arith.constant 0 : i32
    %c0_i32_0 = arith.constant 0 : i32
    return %arg0, %c0_i32 : i32, i32
  }
  func.func @transform_1(%arg0: i32) -> (i32, i32) {
    %c0_i32 = arith.constant 0 : i32
    %c0_i32_0 = arith.constant 0 : i32
    %c0_i32_1 = arith.constant 0 : i32
    return %c0_i32, %c0_i32_0 : i32, i32
  }
  func.func @transform_2(%arg0: i32) -> (i32, i32) {
    %c0_i32 = arith.constant 0 : i32
    %c0_i32_0 = arith.constant 0 : i32
    return %arg0, %c0_i32 : i32, i32
  }
  func.func @transform_3(%arg0: i32) -> (i32, i32) {
    %c0_i32 = arith.constant 0 : i32
    %c0_i32_0 = arith.constant 0 : i32
    %c0_i32_1 = arith.constant 0 : i32
    return %c0_i32, %c0_i32_0 : i32, i32
  }
  func.func @transform_4(%arg0: i32) -> (i32, i32) {
    %c0_i32 = arith.constant 0 : i32
    %c0_i32_0 = arith.constant 0 : i32
    return %arg0, %c0_i32 : i32, i32
  }
  func.func @transform_5(%arg0: i32) -> (i32, i32) {
    %c0_i32 = arith.constant 0 : i32
    %c0_i32_0 = arith.constant 0 : i32
    return %arg0, %c0_i32 : i32, i32
  }
  func.func @transform_6(%arg0: i32) -> (i32, i32) {
    %c0_i32 = arith.constant 0 : i32
    %c0_i32_0 = arith.constant 0 : i32
    return %arg0, %c0_i32 : i32, i32
  }
}

</mosaic_0001>

<llo_original>
// kernel: basic_block_forward.5
$region0: #{basic_block_forward.5}
  #allocation0 [shape = 'u32[]', space=smem, size = 0x4, offset = 0x4, fixed_abs, tag = 'smem constant byte address 0x4 - core index']
  #allocation1 [shape = 'u32[144,128]{1,0:T(1,128)}', space=vmem, size = 0x12000, scoped, tag = 'internal scratch']
  %s0 = inlined_call_operand.vmem [shape: f32[128,128], index: 0, kind: input, shape index: {}]
  %s1 = inlined_call_operand.vmem [shape: f32[1,128], index: 1, kind: input, shape index: {}]
  %s2 = inlined_call_operand.vmem [shape: f32[1,128], index: 2, kind: input, shape index: {}]
  %s3 = inlined_call_operand.vmem [shape: f32[128,128], index: 3, kind: output, shape index: {}]
  %s4 = sld [smem:[#allocation0]]
  $region22: #{basic_block_forward.5} parent=0
    _
  %s6 = ssub.s32 1, %s4
  %s7 = scalar_select 0, %s6, %s4
  // Predicated region
  $region2: #{basic_block_forward.5} parent=0 // pred_check
    _
  $region3: #{basic_block_forward.5} parent=0 // pred_check_branch
    %9 = sbr.rel (0) target = $region5
  $region4: #{basic_block_forward.5} parent=0 // pred_region
    _
  $region5: #{basic_block_forward.5} parent=0 // pred_fallthru
    _
  // Predicated region
  $region6: #{basic_block_forward.5} parent=0 // pred_check
    _
  $region7: #{basic_block_forward.5} parent=0 // pred_check_branch
    %11 = sbr.rel (0) target = $region9
  $region8: #{basic_block_forward.5} parent=0 // pred_region
    _
  $region9: #{basic_block_forward.5} parent=0 // pred_fallthru
    _
  // Predicated region
  $region10: #{basic_block_forward.5} parent=0 // pred_check
    _
  $region11: #{basic_block_forward.5} parent=0 // pred_check_branch
    %13 = sbr.rel (0) target = $region13
  $region12: #{basic_block_forward.5} parent=0 // pred_region
    _
  $region13: #{basic_block_forward.5} parent=0 // pred_fallthru
    _
  %v14 = vld [vmem:[%s0] sm:$0xff]
  %v15 = vld [vmem:[%s0 + $0x8] sm:$0xff]
  %v16 = vld [vmem:[%s0 + $0x10] sm:$0xff]
  %v17 = vld [vmem:[%s0 + $0x18] sm:$0xff]
  %v18 = vld [vmem:[%s0 + $0x20] sm:$0xff]
  %v19 = vld [vmem:[%s0 + $0x28] sm:$0xff]
  %v20 = vld [vmem:[%s0 + $0x30] sm:$0xff]
  %v21 = vld [vmem:[%s0 + $0x38] sm:$0xff]
  %v22 = vld [vmem:[%s0 + $0x40] sm:$0xff]
  %v23 = vld [vmem:[%s0 + $0x48] sm:$0xff]
  %v24 = vld [vmem:[%s0 + $0x50] sm:$0xff]
  %v25 = vld [vmem:[%s0 + $0x58] sm:$0xff]
  %v26 = vld [vmem:[%s0 + $0x60] sm:$0xff]
  %v27 = vld [vmem:[%s0 + $0x68] sm:$0xff]
  %v28 = vld [vmem:[%s0 + $0x70] sm:$0xff]
  %v29 = vld [vmem:[%s0 + $0x78] sm:$0xff]
  %v30 = vld [vmem:[%s1] sm:$0x1]
  %v32 = vlaneseq
  %v33 = vshrl.u32 %v32, 7
  %v34 = vsub.s32 0, %v33
  %v35 = vrot.slane %v30, %v34
  %v37 = vmul.f32 %v14, %v35
  %v38 = vmul.f32 %v15, %v35
  %v39 = vmul.f32 %v16, %v35
  %v40 = vmul.f32 %v17, %v35
  %v41 = vmul.f32 %v18, %v35
  %v42 = vmul.f32 %v19, %v35
  %v43 = vmul.f32 %v20, %v35
  %v44 = vmul.f32 %v21, %v35
  %v45 = vmul.f32 %v22, %v35
  %v46 = vmul.f32 %v23, %v35
  %v47 = vmul.f32 %v24, %v35
  %v48 = vmul.f32 %v25, %v35
  %v49 = vmul.f32 %v26, %v35
  %v50 = vmul.f32 %v27, %v35
  %v51 = vmul.f32 %v28, %v35
  %v52 = vmul.f32 %v29, %v35
  %v53 = vld [vmem:[%s2] sm:$0x1]
  %v55 = vlaneseq
  %v56 = vshrl.u32 %v55, 7
  %v57 = vsub.s32 0, %v56
  %v58 = vrot.slane %v53, %v57
  %v60 = vadd.f32 %v37, %v58
  %v61 = vadd.f32 %v38, %v58
  %v62 = vadd.f32 %v39, %v58
  %v63 = vadd.f32 %v40, %v58
  %v64 = vadd.f32 %v41, %v58
  %v65 = vadd.f32 %v42, %v58
  %v66 = vadd.f32 %v43, %v58
  %v67 = vadd.f32 %v44, %v58
  %v68 = vadd.f32 %v45, %v58
  %v69 = vadd.f32 %v46, %v58
  %v70 = vadd.f32 %v47, %v58
  %v71 = vadd.f32 %v48, %v58
  %v72 = vadd.f32 %v49, %v58
  %v73 = vadd.f32 %v50, %v58
  %v74 = vadd.f32 %v51, %v58
  %v75 = vadd.f32 %v52, %v58
  %v76 = vmax.f32 %v60, 0.0
  %v77 = vmax.f32 %v61, 0.0
  %v78 = vmax.f32 %v62, 0.0
  %v79 = vmax.f32 %v63, 0.0
  %v80 = vmax.f32 %v64, 0.0
  %v81 = vmax.f32 %v65, 0.0
  %v82 = vmax.f32 %v66, 0.0
  %v83 = vmax.f32 %v67, 0.0
  %v84 = vmax.f32 %v68, 0.0
  %v85 = vmax.f32 %v69, 0.0
  %v86 = vmax.f32 %v70, 0.0
  %v87 = vmax.f32 %v71, 0.0
  %v88 = vmax.f32 %v72, 0.0
  %v89 = vmax.f32 %v73, 0.0
  %v90 = vmax.f32 %v74, 0.0
  %v91 = vmax.f32 %v75, 0.0
  %92 = vst [vmem:[%s3] sm:$0xff] %v76
  %93 = vst [vmem:[%s3 + $0x8] sm:$0xff] %v77
  %94 = vst [vmem:[%s3 + $0x10] sm:$0xff] %v78
  %95 = vst [vmem:[%s3 + $0x18] sm:$0xff] %v79
  %96 = vst [vmem:[%s3 + $0x20] sm:$0xff] %v80
  %97 = vst [vmem:[%s3 + $0x28] sm:$0xff] %v81
  %98 = vst [vmem:[%s3 + $0x30] sm:$0xff] %v82
  %99 = vst [vmem:[%s3 + $0x38] sm:$0xff] %v83
  %100 = vst [vmem:[%s3 + $0x40] sm:$0xff] %v84
  %101 = vst [vmem:[%s3 + $0x48] sm:$0xff] %v85
  %102 = vst [vmem:[%s3 + $0x50] sm:$0xff] %v86
  %103 = vst [vmem:[%s3 + $0x58] sm:$0xff] %v87
  %104 = vst [vmem:[%s3 + $0x60] sm:$0xff] %v88
  %105 = vst [vmem:[%s3 + $0x68] sm:$0xff] %v89
  %106 = vst [vmem:[%s3 + $0x70] sm:$0xff] %v90
  %107 = vst [vmem:[%s3 + $0x78] sm:$0xff] %v91
  // Predicated region
  $region14: #{basic_block_forward.5} parent=0 // pred_check
    _
  $region15: #{basic_block_forward.5} parent=0 // pred_check_branch
    %109 = sbr.rel (0) target = $region17
  $region16: #{basic_block_forward.5} parent=0 // pred_region
    _
  $region17: #{basic_block_forward.5} parent=0 // pred_fallthru
    _
  // Predicated region
  $region18: #{basic_block_forward.5} parent=0 // pred_check
    _
  $region19: #{basic_block_forward.5} parent=0 // pred_check_branch
    %111 = sbr.rel (0) target = $region21
  $region20: #{basic_block_forward.5} parent=0 // pred_region
    _
  $region21: #{basic_block_forward.5} parent=0 // pred_fallthru
    _

// kernel: basic_block_forward.4
$region0: #{basic_block_forward.4}
  #allocation0 [shape = 'u32[]', space=smem, size = 0x4, offset = 0x4, fixed_abs, tag = 'smem constant byte address 0x4 - core index']
  #allocation1 [shape = 'u32[144,128]{1,0:T(1,128)}', space=vmem, size = 0x12000, scoped, tag = 'internal scratch']
  %s0 = inlined_call_operand.vmem [shape: f32[128,128], index: 0, kind: input, shape index: {}]
  %s1 = inlined_call_operand.vmem [shape: f32[128,128], index: 1, kind: input, shape index: {}]
  %s2 = inlined_call_operand.vmem [shape: f32[128,128], index: 2, kind: output, shape index: {0}]
  %s3 = inlined_call_operand.vmem [shape: f32[8,128], index: 3, kind: output, shape index: {1}]
  %s4 = inlined_call_operand.vmem [shape: f32[8,128], index: 4, kind: output, shape index: {2}]
  %5 = xla_tuple %s2, %s3, %s4
  %s6 = sld [smem:[#allocation0]]
  $region34: #{basic_block_forward.4} parent=0
    _
  %s8 = ssub.s32 1, %s6
  %s9 = scalar_select 0, %s8, %s6
  // Predicated region
  $region2: #{basic_block_forward.4} parent=0 // pred_check
    _
  $region3: #{basic_block_forward.4} parent=0 // pred_check_branch
    %11 = sbr.rel (0) target = $region5
  $region4: #{basic_block_forward.4} parent=0 // pred_region
    _
  $region5: #{basic_block_forward.4} parent=0 // pred_fallthru
    _
  // Predicated region
  $region6: #{basic_block_forward.4} parent=0 // pred_check
    _
  $region7: #{basic_block_forward.4} parent=0 // pred_check_branch
    %13 = sbr.rel (0) target = $region9
  $region8: #{basic_block_forward.4} parent=0 // pred_region
    _
  $region9: #{basic_block_forward.4} parent=0 // pred_fallthru
    _
  %v14 = vld [vmem:[%s0] sm:$0xff]
  %v15 = vld [vmem:[%s0 + $0x8] sm:$0xff]
  %v16 = vld [vmem:[%s0 + $0x10] sm:$0xff]
  %v17 = vld [vmem:[%s0 + $0x18] sm:$0xff]
  %v18 = vld [vmem:[%s0 + $0x20] sm:$0xff]
  %v19 = vld [vmem:[%s0 + $0x28] sm:$0xff]
  %v20 = vld [vmem:[%s0 + $0x30] sm:$0xff]
  %v21 = vld [vmem:[%s0 + $0x38] sm:$0xff]
  %v22 = vld [vmem:[%s0 + $0x40] sm:$0xff]
  %v23 = vld [vmem:[%s0 + $0x48] sm:$0xff]
  %v24 = vld [vmem:[%s0 + $0x50] sm:$0xff]
  %v25 = vld [vmem:[%s0 + $0x58] sm:$0xff]
  %v26 = vld [vmem:[%s0 + $0x60] sm:$0xff]
  %v27 = vld [vmem:[%s0 + $0x68] sm:$0xff]
  %v28 = vld [vmem:[%s0 + $0x70] sm:$0xff]
  %v29 = vld [vmem:[%s0 + $0x78] sm:$0xff]
  %v30 = vld [vmem:[%s1] sm:$0xff]
  %v31 = vld [vmem:[%s1 + $0x8] sm:$0xff]
  %v32 = vld [vmem:[%s1 + $0x10] sm:$0xff]
  %v33 = vld [vmem:[%s1 + $0x18] sm:$0xff]
  %v34 = vld [vmem:[%s1 + $0x20] sm:$0xff]
  %v35 = vld [vmem:[%s1 + $0x28] sm:$0xff]
  %v36 = vld [vmem:[%s1 + $0x30] sm:$0xff]
  %v37 = vld [vmem:[%s1 + $0x38] sm:$0xff]
  %v38 = vld [vmem:[%s1 + $0x40] sm:$0xff]
  %v39 = vld [vmem:[%s1 + $0x48] sm:$0xff]
  %v40 = vld [vmem:[%s1 + $0x50] sm:$0xff]
  %v41 = vld [vmem:[%s1 + $0x58] sm:$0xff]
  %v42 = vld [vmem:[%s1 + $0x60] sm:$0xff]
  %v43 = vld [vmem:[%s1 + $0x68] sm:$0xff]
  %v44 = vld [vmem:[%s1 + $0x70] sm:$0xff]
  %v45 = vld [vmem:[%s1 + $0x78] sm:$0xff]
  %46 = vmatprep.subr.mxu0 0.0
  %47 = vmatpush1.msra.mxu0 %v45
  %48 = vmatprep.subr.mxu0 0.0
  %49 = vmatpush1.msra.mxu0 %v44
  %50 = vmatprep.subr.mxu0 0.0
  %51 = vmatpush1.msra.mxu0 %v43
  %52 = vmatprep.subr.mxu0 0.0
  %53 = vmatpush1.msra.mxu0 %v42
  %54 = vmatprep.subr.mxu0 0.0
  %55 = vmatpush1.msra.mxu0 %v41
  %56 = vmatprep.subr.mxu0 0.0
  %57 = vmatpush1.msra.mxu0 %v40
  %58 = vmatprep.subr.mxu0 0.0
  %59 = vmatpush1.msra.mxu0 %v39
  %60 = vmatprep.subr.mxu0 0.0
  %61 = vmatpush1.msra.mxu0 %v38
  %62 = vmatprep.subr.mxu0 0.0
  %63 = vmatpush1.msra.mxu0 %v37
  %64 = vmatprep.subr.mxu0 0.0
  %65 = vmatpush1.msra.mxu0 %v36
  %66 = vmatprep.subr.mxu0 0.0
  %67 = vmatpush1.msra.mxu0 %v35
  %68 = vmatprep.subr.mxu0 0.0
  %69 = vmatpush1.msra.mxu0 %v34
  %70 = vmatprep.subr.mxu0 0.0
  %71 = vmatpush1.msra.mxu0 %v33
  %72 = vmatprep.subr.mxu0 0.0
  %73 = vmatpush1.msra.mxu0 %v32
  %74 = vmatprep.subr.mxu0 0.0
  %75 = vmatpush1.msra.mxu0 %v31
  %76 = vmatprep.subr.mxu0 0.0
  %77 = vmatpush1.msra.mxu0 %v30
  %78 = vmatprep.subr.mxu0 0.0
  %79 = vmatpush2.msra.mxu0 0.0
  %80 = vmatprep.subr.mxu0 0.0
  %81 = vmatpush2.msra.mxu0 0.0
  %82 = vmatprep.subr.mxu0 0.0
  %83 = vmatpush2.msra.mxu0 0.0
  %84 = vmatprep.subr.mxu0 0.0
  %85 = vmatpush2.msra.mxu0 0.0
  %86 = vmatprep.subr.mxu0 0.0
  %87 = vmatpush2.msra.mxu0 0.0
  %88 = vmatprep.subr.mxu0 0.0
  %89 = vmatpush2.msra.mxu0 0.0
  %90 = vmatprep.subr.mxu0 0.0
  %91 = vmatpush2.msra.mxu0 0.0
  %92 = vmatprep.subr.mxu0 0.0
  %93 = vmatpush2.msra.mxu0 0.0
  %94 = vmatprep.subr.mxu0 0.0
  %95 = vmatpush2.msra.mxu0 0.0
  %96 = vmatprep.subr.mxu0 0.0
  %97 = vmatpush2.msra.mxu0 0.0
  %98 = vmatprep.subr.mxu0 0.0
  %99 = vmatpush2.msra.mxu0 0.0
  %100 = vmatprep.subr.mxu0 0.0
  %101 = vmatpush2.msra.mxu0 0.0
  %102 = vmatprep.subr.mxu0 0.0
  %103 = vmatpush2.msra.mxu0 0.0
  %104 = vmatprep.subr.mxu0 0.0
  %105 = vmatpush2.msra.mxu0 0.0
  %106 = vmatprep.subr.mxu0 0.0
  %107 = vmatpush2.msra.mxu0 0.0
  %108 = vmatprep.subr.mxu0 0.0
  %109 = vmatpush2.msra.mxu0 0.0
  %110 = vmatprep.mubr.f32.mxu0 0.0
  %111 = vmatmul.mubr.f32.gmra.mxu0 %v14
  %v112 = vpop.f32.mrf.mxu0
  %v113 = vadd.f32 0.0, %v112
  %v114 = vpop.f32.mrf.mxu0
  %115 = vmatprep.mubr.f32.mxu0 0.0
  %116 = vmatmul.mubr.f32.gmra.mxu0 %v15
  %v117 = vpop.f32.mrf.mxu0
  %v118 = vadd.f32 0.0, %v117
  %v119 = vpop.f32.mrf.mxu0
  %120 = vmatprep.mubr.f32.mxu0 0.0
  %121 = vmatmul.mubr.f32.gmra.mxu0 %v16
  %v122 = vpop.f32.mrf.mxu0
  %v123 = vadd.f32 0.0, %v122
  %v124 = vpop.f32.mrf.mxu0
  %125 = vmatprep.mubr.f32.mxu0 0.0
  %126 = vmatmul.mubr.f32.gmra.mxu0 %v17
  %v127 = vpop.f32.mrf.mxu0
  %v128 = vadd.f32 0.0, %v127
  %v129 = vpop.f32.mrf.mxu0
  %130 = vmatprep.mubr.f32.mxu0 0.0
  %131 = vmatmul.mubr.f32.gmra.mxu0 %v18
  %v132 = vpop.f32.mrf.mxu0
  %v133 = vadd.f32 0.0, %v132
  %v134 = vpop.f32.mrf.mxu0
  %135 = vmatprep.mubr.f32.mxu0 0.0
  %136 = vmatmul.mubr.f32.gmra.mxu0 %v19
  %v137 = vpop.f32.mrf.mxu0
  %v138 = vadd.f32 0.0, %v137
  %v139 = vpop.f32.mrf.mxu0
  %140 = vmatprep.mubr.f32.mxu0 0.0
  %141 = vmatmul.mubr.f32.gmra.mxu0 %v20
  %v142 = vpop.f32.mrf.mxu0
  %v143 = vadd.f32 0.0, %v142
  %v144 = vpop.f32.mrf.mxu0
  %145 = vmatprep.mubr.f32.mxu0 0.0
  %146 = vmatmul.mubr.f32.gmra.mxu0 %v21
  %v147 = vpop.f32.mrf.mxu0
  %v148 = vadd.f32 0.0, %v147
  %v149 = vpop.f32.mrf.mxu0
  %150 = vmatprep.mubr.f32.mxu0 0.0
  %151 = vmatmul.mubr.f32.gmra.mxu0 %v22
  %v152 = vpop.f32.mrf.mxu0
  %v153 = vadd.f32 0.0, %v152
  %v154 = vpop.f32.mrf.mxu0
  %155 = vmatprep.mubr.f32.mxu0 0.0
  %156 = vmatmul.mubr.f32.gmra.mxu0 %v23
  %v157 = vpop.f32.mrf.mxu0
  %v158 = vadd.f32 0.0, %v157
  %v159 = vpop.f32.mrf.mxu0
  %160 = vmatprep.mubr.f32.mxu0 0.0
  %161 = vmatmul.mubr.f32.gmra.mxu0 %v24
  %v162 = vpop.f32.mrf.mxu0
  %v163 = vadd.f32 0.0, %v162
  %v164 = vpop.f32.mrf.mxu0
  %165 = vmatprep.mubr.f32.mxu0 0.0
  %166 = vmatmul.mubr.f32.gmra.mxu0 %v25
  %v167 = vpop.f32.mrf.mxu0
  %v168 = vadd.f32 0.0, %v167
  %v169 = vpop.f32.mrf.mxu0
  %170 = vmatprep.mubr.f32.mxu0 0.0
  %171 = vmatmul.mubr.f32.gmra.mxu0 %v26
  %v172 = vpop.f32.mrf.mxu0
  %v173 = vadd.f32 0.0, %v172
  %v174 = vpop.f32.mrf.mxu0
  %175 = vmatprep.mubr.f32.mxu0 0.0
  %176 = vmatmul.mubr.f32.gmra.mxu0 %v27
  %v177 = vpop.f32.mrf.mxu0
  %v178 = vadd.f32 0.0, %v177
  %v179 = vpop.f32.mrf.mxu0
  %180 = vmatprep.mubr.f32.mxu0 0.0
  %181 = vmatmul.mubr.f32.gmra.mxu0 %v28
  %v182 = vpop.f32.mrf.mxu0
  %v183 = vadd.f32 0.0, %v182
  %v184 = vpop.f32.mrf.mxu0
  %185 = vmatprep.mubr.f32.mxu0 0.0
  %186 = vmatmul.mubr.f32.gmra.mxu0 %v29
  %v187 = vpop.f32.mrf.mxu0
  %v188 = vadd.f32 0.0, %v187
  %v189 = vpop.f32.mrf.mxu0
  %190 = vdwg.mxu0
  %191 = vst [vmem:[%s2] sm:$0xff] %v113
  %192 = vst [vmem:[%s2 + $0x8] sm:$0xff] %v118
  %193 = vst [vmem:[%s2 + $0x10] sm:$0xff] %v123
  %194 = vst [vmem:[%s2 + $0x18] sm:$0xff] %v128
  %195 = vst [vmem:[%s2 + $0x20] sm:$0xff] %v133
  %196 = vst [vmem:[%s2 + $0x28] sm:$0xff] %v138
  %197 = vst [vmem:[%s2 + $0x30] sm:$0xff] %v143
  %198 = vst [vmem:[%s2 + $0x38] sm:$0xff] %v148
  %199 = vst [vmem:[%s2 + $0x40] sm:$0xff] %v153
  %200 = vst [vmem:[%s2 + $0x48] sm:$0xff] %v158
  %201 = vst [vmem:[%s2 + $0x50] sm:$0xff] %v163
  %202 = vst [vmem:[%s2 + $0x58] sm:$0xff] %v168
  %203 = vst [vmem:[%s2 + $0x60] sm:$0xff] %v173
  %204 = vst [vmem:[%s2 + $0x68] sm:$0xff] %v178
  %205 = vst [vmem:[%s2 + $0x70] sm:$0xff] %v183
  %206 = vst [vmem:[%s2 + $0x78] sm:$0xff] %v188
  %v207 = vadd.f32 %v113, %v118
  %v208 = vadd.f32 %v207, %v123
  %v209 = vadd.f32 %v208, %v128
  %v210 = vadd.f32 %v209, %v133
  %v211 = vadd.f32 %v210, %v138
  %v212 = vadd.f32 %v211, %v143
  %v213 = vadd.f32 %v212, %v148
  %v214 = vadd.f32 %v213, %v153
  %v215 = vadd.f32 %v214, %v158
  %v216 = vadd.f32 %v215, %v163
  %v217 = vadd.f32 %v216, %v168
  %v218 = vadd.f32 %v217, %v173
  %v219 = vadd.f32 %v218, %v178
  %v220 = vadd.f32 %v219, %v183
  %v221 = vadd.f32 %v220, %v188
  %v222 = vrot.slane %v221, 4
  %v223 = vadd.f32 %v221, %v222
  %v224 = vrot.slane %v223, 2
  %v225 = vadd.f32 %v223, %v224
  %v226 = vrot.slane %v225, 1
  %v227 = vadd.f32 %v225, %v226
  %228 = vst [vmem:[%s3] sm:$0xff] %v227
  %v229 = vmul.f32 %v113, %v113
  %v230 = vmul.f32 %v118, %v118
  %v231 = vmul.f32 %v123, %v123
  %v232 = vmul.f32 %v128, %v128
  %v233 = vmul.f32 %v133, %v133
  %v234 = vmul.f32 %v138, %v138
  %v235 = vmul.f32 %v143, %v143
  %v236 = vmul.f32 %v148, %v148
  %v237 = vmul.f32 %v153, %v153
  %v238 = vmul.f32 %v158, %v158
  %v239 = vmul.f32 %v163, %v163
  %v240 = vmul.f32 %v168, %v168
  %v241 = vmul.f32 %v173, %v173
  %v242 = vmul.f32 %v178, %v178
  %v243 = vmul.f32 %v183, %v183
  %v244 = vmul.f32 %v188, %v188
  %v245 = vadd.f32 %v229, %v230
  %v246 = vadd.f32 %v245, %v231
  %v247 = vadd.f32 %v246, %v232
  %v248 = vadd.f32 %v247, %v233
  %v249 = vadd.f32 %v248, %v234
  %v250 = vadd.f32 %v249, %v235
  %v251 = vadd.f32 %v250, %v236
  %v252 = vadd.f32 %v251, %v237
  %v253 = vadd.f32 %v252, %v238
  %v254 = vadd.f32 %v253, %v239
  %v255 = vadd.f32 %v254, %v240
  %v256 = vadd.f32 %v255, %v241
  %v257 = vadd.f32 %v256, %v242
  %v258 = vadd.f32 %v257, %v243
  %v259 = vadd.f32 %v258, %v244
  %v260 = vrot.slane %v259, 4
  %v261 = vadd.f32 %v259, %v260
  %v262 = vrot.slane %v261, 2
  %v263 = vadd.f32 %v261, %v262
  %v264 = vrot.slane %v263, 1
  %v265 = vadd.f32 %v263, %v264
  %266 = vst [vmem:[%s4] sm:$0xff] %v265
  // Predicated region
  $region10: #{basic_block_forward.4} parent=0 // pred_check
    _
  $region11: #{basic_block_forward.4} parent=0 // pred_check_branch
    %268 = sbr.rel (0) target = $region13
  $region12: #{basic_block_forward.4} parent=0 // pred_region
    _
  $region13: #{basic_block_forward.4} parent=0 // pred_fallthru
    _
  // Predicated region
  $region14: #{basic_block_forward.4} parent=0 // pred_check
    _
  $region15: #{basic_block_forward.4} parent=0 // pred_check_branch
    %270 = sbr.rel (0) target = $region17
  $region16: #{basic_block_forward.4} parent=0 // pred_region
    _
  $region17: #{basic_block_forward.4} parent=0 // pred_fallthru
    _
  // Predicated region
  $region18: #{basic_block_forward.4} parent=0 // pred_check
    _
  $region19: #{basic_block_forward.4} parent=0 // pred_check_branch
    %272 = sbr.rel (0) target = $region21
  $region20: #{basic_block_forward.4} parent=0 // pred_region
    _
  $region21: #{basic_block_forward.4} parent=0 // pred_fallthru
    _
  // Predicated region
  $region22: #{basic_block_forward.4} parent=0 // pred_check
    _
  $region23: #{basic_block_forward.4} parent=0 // pred_check_branch
    %274 = sbr.rel (0) target = $region25
  $region24: #{basic_block_forward.4} parent=0 // pred_region
    _
  $region25: #{basic_block_forward.4} parent=0 // pred_fallthru
    _
  // Predicated region
  $region26: #{basic_block_forward.4} parent=0 // pred_check
    _
  $region27: #{basic_block_forward.4} parent=0 // pred_check_branch
    %276 = sbr.rel (0) target = $region29
  $region28: #{basic_block_forward.4} parent=0 // pred_region
    _
  $region29: #{basic_block_forward.4} parent=0 // pred_fallthru
    _
  // Predicated region
  $region30: #{basic_block_forward.4} parent=0 // pred_check
    _
  $region31: #{basic_block_forward.4} parent=0 // pred_check_branch
    %278 = sbr.rel (0) target = $region33
  $region32: #{basic_block_forward.4} parent=0 // pred_region
    _
  $region33: #{basic_block_forward.4} parent=0 // pred_fallthru
    _

// kernel: basic_block_forward.6
$region0: #{basic_block_forward.6}
  #allocation0 [shape = 'u32[]', space=smem, size = 0x4, offset = 0x4, fixed_abs, tag = 'smem constant byte address 0x4 - core index']
  #allocation1 [shape = 'u32[144,128]{1,0:T(1,128)}', space=vmem, size = 0x12000, scoped, tag = 'internal scratch']
  %s0 = inlined_call_operand.vmem [shape: f32[128,128], index: 0, kind: input, shape index: {}]
  %s1 = inlined_call_operand.vmem [shape: f32[128,128], index: 1, kind: input, shape index: {}]
  %s2 = inlined_call_operand.vmem [shape: f32[128,128], index: 2, kind: input, shape index: {}]
  %s3 = inlined_call_operand.vmem [shape: f32[128,128], index: 3, kind: input, shape index: {}]
  %s4 = inlined_call_operand.vmem [shape: f32[128,128], index: 4, kind: output, shape index: {0}]
  %s5 = inlined_call_operand.vmem [shape: f32[8,128], index: 5, kind: output, shape index: {1}]
  %s6 = inlined_call_operand.vmem [shape: f32[8,128], index: 6, kind: output, shape index: {2}]
  %7 = xla_tuple %s4, %s5, %s6
  %s8 = sld [smem:[#allocation0]]
  $region42: #{basic_block_forward.6} parent=0
    _
  %s10 = ssub.s32 1, %s8
  %s11 = scalar_select 0, %s10, %s8
  // Predicated region
  $region2: #{basic_block_forward.6} parent=0 // pred_check
    _
  $region3: #{basic_block_forward.6} parent=0 // pred_check_branch
    %13 = sbr.rel (0) target = $region5
  $region4: #{basic_block_forward.6} parent=0 // pred_region
    _
  $region5: #{basic_block_forward.6} parent=0 // pred_fallthru
    _
  // Predicated region
  $region6: #{basic_block_forward.6} parent=0 // pred_check
    _
  $region7: #{basic_block_forward.6} parent=0 // pred_check_branch
    %15 = sbr.rel (0) target = $region9
  $region8: #{basic_block_forward.6} parent=0 // pred_region
    _
  $region9: #{basic_block_forward.6} parent=0 // pred_fallthru
    _
  // Predicated region
  $region10: #{basic_block_forward.6} parent=0 // pred_check
    _
  $region11: #{basic_block_forward.6} parent=0 // pred_check_branch
    %17 = sbr.rel (0) target = $region13
  $region12: #{basic_block_forward.6} parent=0 // pred_region
    _
  $region13: #{basic_block_forward.6} parent=0 // pred_fallthru
    _
  // Predicated region
  $region14: #{basic_block_forward.6} parent=0 // pred_check
    _
  $region15: #{basic_block_forward.6} parent=0 // pred_check_branch
    %19 = sbr.rel (0) target = $region17
  $region16: #{basic_block_forward.6} parent=0 // pred_region
    _
  $region17: #{basic_block_forward.6} parent=0 // pred_fallthru
    _
  %v20 = vld [vmem:[%s0] sm:$0xff]
  %v21 = vld [vmem:[%s0 + $0x8] sm:$0xff]
  %v22 = vld [vmem:[%s0 + $0x10] sm:$0xff]
  %v23 = vld [vmem:[%s0 + $0x18] sm:$0xff]
  %v24 = vld [vmem:[%s0 + $0x20] sm:$0xff]
  %v25 = vld [vmem:[%s0 + $0x28] sm:$0xff]
  %v26 = vld [vmem:[%s0 + $0x30] sm:$0xff]
  %v27 = vld [vmem:[%s0 + $0x38] sm:$0xff]
  %v28 = vld [vmem:[%s0 + $0x40] sm:$0xff]
  %v29 = vld [vmem:[%s0 + $0x48] sm:$0xff]
  %v30 = vld [vmem:[%s0 + $0x50] sm:$0xff]
  %v31 = vld [vmem:[%s0 + $0x58] sm:$0xff]
  %v32 = vld [vmem:[%s0 + $0x60] sm:$0xff]
  %v33 = vld [vmem:[%s0 + $0x68] sm:$0xff]
  %v34 = vld [vmem:[%s0 + $0x70] sm:$0xff]
  %v35 = vld [vmem:[%s0 + $0x78] sm:$0xff]
  %v36 = vld [vmem:[%s1] sm:$0xff]
  %v37 = vld [vmem:[%s1 + $0x8] sm:$0xff]
  %v38 = vld [vmem:[%s1 + $0x10] sm:$0xff]
  %v39 = vld [vmem:[%s1 + $0x18] sm:$0xff]
  %v40 = vld [vmem:[%s1 + $0x20] sm:$0xff]
  %v41 = vld [vmem:[%s1 + $0x28] sm:$0xff]
  %v42 = vld [vmem:[%s1 + $0x30] sm:$0xff]
  %v43 = vld [vmem:[%s1 + $0x38] sm:$0xff]
  %v44 = vld [vmem:[%s1 + $0x40] sm:$0xff]
  %v45 = vld [vmem:[%s1 + $0x48] sm:$0xff]
  %v46 = vld [vmem:[%s1 + $0x50] sm:$0xff]
  %v47 = vld [vmem:[%s1 + $0x58] sm:$0xff]
  %v48 = vld [vmem:[%s1 + $0x60] sm:$0xff]
  %v49 = vld [vmem:[%s1 + $0x68] sm:$0xff]
  %v50 = vld [vmem:[%s1 + $0x70] sm:$0xff]
  %v51 = vld [vmem:[%s1 + $0x78] sm:$0xff]
  %v52 = vld [vmem:[%s2] sm:$0xff]
  %v53 = vld [vmem:[%s2 + $0x8] sm:$0xff]
  %v54 = vld [vmem:[%s2 + $0x10] sm:$0xff]
  %v55 = vld [vmem:[%s2 + $0x18] sm:$0xff]
  %v56 = vld [vmem:[%s2 + $0x20] sm:$0xff]
  %v57 = vld [vmem:[%s2 + $0x28] sm:$0xff]
  %v58 = vld [vmem:[%s2 + $0x30] sm:$0xff]
  %v59 = vld [vmem:[%s2 + $0x38] sm:$0xff]
  %v60 = vld [vmem:[%s2 + $0x40] sm:$0xff]
  %v61 = vld [vmem:[%s2 + $0x48] sm:$0xff]
  %v62 = vld [vmem:[%s2 + $0x50] sm:$0xff]
  %v63 = vld [vmem:[%s2 + $0x58] sm:$0xff]
  %v64 = vld [vmem:[%s2 + $0x60] sm:$0xff]
  %v65 = vld [vmem:[%s2 + $0x68] sm:$0xff]
  %v66 = vld [vmem:[%s2 + $0x70] sm:$0xff]
  %v67 = vld [vmem:[%s2 + $0x78] sm:$0xff]
  %v68 = vld [vmem:[%s3] sm:$0xff]
  %v69 = vld [vmem:[%s3 + $0x8] sm:$0xff]
  %v70 = vld [vmem:[%s3 + $0x10] sm:$0xff]
  %v71 = vld [vmem:[%s3 + $0x18] sm:$0xff]
  %v72 = vld [vmem:[%s3 + $0x20] sm:$0xff]
  %v73 = vld [vmem:[%s3 + $0x28] sm:$0xff]
  %v74 = vld [vmem:[%s3 + $0x30] sm:$0xff]
  %v75 = vld [vmem:[%s3 + $0x38] sm:$0xff]
  %v76 = vld [vmem:[%s3 + $0x40] sm:$0xff]
  %v77 = vld [vmem:[%s3 + $0x48] sm:$0xff]
  %v78 = vld [vmem:[%s3 + $0x50] sm:$0xff]
  %v79 = vld [vmem:[%s3 + $0x58] sm:$0xff]
  %v80 = vld [vmem:[%s3 + $0x60] sm:$0xff]
  %v81 = vld [vmem:[%s3 + $0x68] sm:$0xff]
  %v82 = vld [vmem:[%s3 + $0x70] sm:$0xff]
  %v83 = vld [vmem:[%s3 + $0x78] sm:$0xff]
  %84 = vmatprep.subr.mxu0 0.0
  %85 = vmatpush1.msra.mxu0 %v83
  %86 = vmatprep.subr.mxu0 0.0
  %87 = vmatpush1.msra.mxu0 %v82
  %88 = vmatprep.subr.mxu0 0.0
  %89 = vmatpush1.msra.mxu0 %v81
  %90 = vmatprep.subr.mxu0 0.0
  %91 = vmatpush1.msra.mxu0 %v80
  %92 = vmatprep.subr.mxu0 0.0
  %93 = vmatpush1.msra.mxu0 %v79
  %94 = vmatprep.subr.mxu0 0.0
  %95 = vmatpush1.msra.mxu0 %v78
  %96 = vmatprep.subr.mxu0 0.0
  %97 = vmatpush1.msra.mxu0 %v77
  %98 = vmatprep.subr.mxu0 0.0
  %99 = vmatpush1.msra.mxu0 %v76
  %100 = vmatprep.subr.mxu0 0.0
  %101 = vmatpush1.msra.mxu0 %v75
  %102 = vmatprep.subr.mxu0 0.0
  %103 = vmatpush1.msra.mxu0 %v74
  %104 = vmatprep.subr.mxu0 0.0
  %105 = vmatpush1.msra.mxu0 %v73
  %106 = vmatprep.subr.mxu0 0.0
  %107 = vmatpush1.msra.mxu0 %v72
  %108 = vmatprep.subr.mxu0 0.0
  %109 = vmatpush1.msra.mxu0 %v71
  %110 = vmatprep.subr.mxu0 0.0
  %111 = vmatpush1.msra.mxu0 %v70
  %112 = vmatprep.subr.mxu0 0.0
  %113 = vmatpush1.msra.mxu0 %v69
  %114 = vmatprep.subr.mxu0 0.0
  %115 = vmatpush1.msra.mxu0 %v68
  %116 = vmatprep.subr.mxu0 0.0
  %117 = vmatpush2.msra.mxu0 0.0
  %118 = vmatprep.subr.mxu0 0.0
  %119 = vmatpush2.msra.mxu0 0.0
  %120 = vmatprep.subr.mxu0 0.0
  %121 = vmatpush2.msra.mxu0 0.0
  %122 = vmatprep.subr.mxu0 0.0
  %123 = vmatpush2.msra.mxu0 0.0
  %124 = vmatprep.subr.mxu0 0.0
  %125 = vmatpush2.msra.mxu0 0.0
  %126 = vmatprep.subr.mxu0 0.0
  %127 = vmatpush2.msra.mxu0 0.0
  %128 = vmatprep.subr.mxu0 0.0
  %129 = vmatpush2.msra.mxu0 0.0
  %130 = vmatprep.subr.mxu0 0.0
  %131 = vmatpush2.msra.mxu0 0.0
  %132 = vmatprep.subr.mxu0 0.0
  %133 = vmatpush2.msra.mxu0 0.0
  %134 = vmatprep.subr.mxu0 0.0
  %135 = vmatpush2.msra.mxu0 0.0
  %136 = vmatprep.subr.mxu0 0.0
  %137 = vmatpush2.msra.mxu0 0.0
  %138 = vmatprep.subr.mxu0 0.0
  %139 = vmatpush2.msra.mxu0 0.0
  %140 = vmatprep.subr.mxu0 0.0
  %141 = vmatpush2.msra.mxu0 0.0
  %142 = vmatprep.subr.mxu0 0.0
  %143 = vmatpush2.msra.mxu0 0.0
  %144 = vmatprep.subr.mxu0 0.0
  %145 = vmatpush2.msra.mxu0 0.0
  %146 = vmatprep.subr.mxu0 0.0
  %147 = vmatpush2.msra.mxu0 0.0
  %148 = vmatprep.mubr.f32.mxu0 0.0
  %149 = vmatmul.mubr.f32.gmra.mxu0 %v52
  %v150 = vpop.f32.mrf.mxu0
  %v151 = vadd.f32 0.0, %v150
  %v152 = vpop.f32.mrf.mxu0
  %153 = vmatprep.mubr.f32.mxu0 0.0
  %154 = vmatmul.mubr.f32.gmra.mxu0 %v53
  %v155 = vpop.f32.mrf.mxu0
  %v156 = vadd.f32 0.0, %v155
  %v157 = vpop.f32.mrf.mxu0
  %158 = vmatprep.mubr.f32.mxu0 0.0
  %159 = vmatmul.mubr.f32.gmra.mxu0 %v54
  %v160 = vpop.f32.mrf.mxu0
  %v161 = vadd.f32 0.0, %v160
  %v162 = vpop.f32.mrf.mxu0
  %163 = vmatprep.mubr.f32.mxu0 0.0
  %164 = vmatmul.mubr.f32.gmra.mxu0 %v55
  %v165 = vpop.f32.mrf.mxu0
  %v166 = vadd.f32 0.0, %v165
  %v167 = vpop.f32.mrf.mxu0
  %168 = vmatprep.mubr.f32.mxu0 0.0
  %169 = vmatmul.mubr.f32.gmra.mxu0 %v56
  %v170 = vpop.f32.mrf.mxu0
  %v171 = vadd.f32 0.0, %v170
  %v172 = vpop.f32.mrf.mxu0
  %173 = vmatprep.mubr.f32.mxu0 0.0
  %174 = vmatmul.mubr.f32.gmra.mxu0 %v57
  %v175 = vpop.f32.mrf.mxu0
  %v176 = vadd.f32 0.0, %v175
  %v177 = vpop.f32.mrf.mxu0
  %178 = vmatprep.mubr.f32.mxu0 0.0
  %179 = vmatmul.mubr.f32.gmra.mxu0 %v58
  %v180 = vpop.f32.mrf.mxu0
  %v181 = vadd.f32 0.0, %v180
  %v182 = vpop.f32.mrf.mxu0
  %183 = vmatprep.mubr.f32.mxu0 0.0
  %184 = vmatmul.mubr.f32.gmra.mxu0 %v59
  %v185 = vpop.f32.mrf.mxu0
  %v186 = vadd.f32 0.0, %v185
  %v187 = vpop.f32.mrf.mxu0
  %188 = vmatprep.mubr.f32.mxu0 0.0
  %189 = vmatmul.mubr.f32.gmra.mxu0 %v60
  %v190 = vpop.f32.mrf.mxu0
  %v191 = vadd.f32 0.0, %v190
  %v192 = vpop.f32.mrf.mxu0
  %193 = vmatprep.mubr.f32.mxu0 0.0
  %194 = vmatmul.mubr.f32.gmra.mxu0 %v61
  %v195 = vpop.f32.mrf.mxu0
  %v196 = vadd.f32 0.0, %v195
  %v197 = vpop.f32.mrf.mxu0
  %198 = vmatprep.mubr.f32.mxu0 0.0
  %199 = vmatmul.mubr.f32.gmra.mxu0 %v62
  %v200 = vpop.f32.mrf.mxu0
  %v201 = vadd.f32 0.0, %v200
  %v202 = vpop.f32.mrf.mxu0
  %203 = vmatprep.mubr.f32.mxu0 0.0
  %204 = vmatmul.mubr.f32.gmra.mxu0 %v63
  %v205 = vpop.f32.mrf.mxu0
  %v206 = vadd.f32 0.0, %v205
  %v207 = vpop.f32.mrf.mxu0
  %208 = vmatprep.mubr.f32.mxu0 0.0
  %209 = vmatmul.mubr.f32.gmra.mxu0 %v64
  %v210 = vpop.f32.mrf.mxu0
  %v211 = vadd.f32 0.0, %v210
  %v212 = vpop.f32.mrf.mxu0
  %213 = vmatprep.mubr.f32.mxu0 0.0
  %214 = vmatmul.mubr.f32.gmra.mxu0 %v65
  %v215 = vpop.f32.mrf.mxu0
  %v216 = vadd.f32 0.0, %v215
  %v217 = vpop.f32.mrf.mxu0
  %218 = vmatprep.mubr.f32.mxu0 0.0
  %219 = vmatmul.mubr.f32.gmra.mxu0 %v66
  %v220 = vpop.f32.mrf.mxu0
  %v221 = vadd.f32 0.0, %v220
  %v222 = vpop.f32.mrf.mxu0
  %223 = vmatprep.mubr.f32.mxu0 0.0
  %224 = vmatmul.mubr.f32.gmra.mxu0 %v67
  %v225 = vpop.f32.mrf.mxu0
  %v226 = vadd.f32 0.0, %v225
  %v227 = vpop.f32.mrf.mxu0
  %228 = vdwg.mxu0
  %229 = vmatprep.subr.mxu0 0.0
  %230 = vmatpush1.msra.mxu0 %v51
  %231 = vmatprep.subr.mxu0 0.0
  %232 = vmatpush1.msra.mxu0 %v50
  %233 = vmatprep.subr.mxu0 0.0
  %234 = vmatpush1.msra.mxu0 %v49
  %235 = vmatprep.subr.mxu0 0.0
  %236 = vmatpush1.msra.mxu0 %v48
  %237 = vmatprep.subr.mxu0 0.0
  %238 = vmatpush1.msra.mxu0 %v47
  %239 = vmatprep.subr.mxu0 0.0
  %240 = vmatpush1.msra.mxu0 %v46
  %241 = vmatprep.subr.mxu0 0.0
  %242 = vmatpush1.msra.mxu0 %v45
  %243 = vmatprep.subr.mxu0 0.0
  %244 = vmatpush1.msra.mxu0 %v44
  %245 = vmatprep.subr.mxu0 0.0
  %246 = vmatpush1.msra.mxu0 %v43
  %247 = vmatprep.subr.mxu0 0.0
  %248 = vmatpush1.msra.mxu0 %v42
  %249 = vmatprep.subr.mxu0 0.0
  %250 = vmatpush1.msra.mxu0 %v41
  %251 = vmatprep.subr.mxu0 0.0
  %252 = vmatpush1.msra.mxu0 %v40
  %253 = vmatprep.subr.mxu0 0.0
  %254 = vmatpush1.msra.mxu0 %v39
  %255 = vmatprep.subr.mxu0 0.0
  %256 = vmatpush1.msra.mxu0 %v38
  %257 = vmatprep.subr.mxu0 0.0
  %258 = vmatpush1.msra.mxu0 %v37
  %259 = vmatprep.subr.mxu0 0.0
  %260 = vmatpush1.msra.mxu0 %v36
  %261 = vmatprep.subr.mxu0 0.0
  %262 = vmatpush2.msra.mxu0 0.0
  %263 = vmatprep.subr.mxu0 0.0
  %264 = vmatpush2.msra.mxu0 0.0
  %265 = vmatprep.subr.mxu0 0.0
  %266 = vmatpush2.msra.mxu0 0.0
  %267 = vmatprep.subr.mxu0 0.0
  %268 = vmatpush2.msra.mxu0 0.0
  %269 = vmatprep.subr.mxu0 0.0
  %270 = vmatpush2.msra.mxu0 0.0
  %271 = vmatprep.subr.mxu0 0.0
  %272 = vmatpush2.msra.mxu0 0.0
  %273 = vmatprep.subr.mxu0 0.0
  %274 = vmatpush2.msra.mxu0 0.0
  %275 = vmatprep.subr.mxu0 0.0
  %276 = vmatpush2.msra.mxu0 0.0
  %277 = vmatprep.subr.mxu0 0.0
  %278 = vmatpush2.msra.mxu0 0.0
  %279 = vmatprep.subr.mxu0 0.0
  %280 = vmatpush2.msra.mxu0 0.0
  %281 = vmatprep.subr.mxu0 0.0
  %282 = vmatpush2.msra.mxu0 0.0
  %283 = vmatprep.subr.mxu0 0.0
  %284 = vmatpush2.msra.mxu0 0.0
  %285 = vmatprep.subr.mxu0 0.0
  %286 = vmatpush2.msra.mxu0 0.0
  %287 = vmatprep.subr.mxu0 0.0
  %288 = vmatpush2.msra.mxu0 0.0
  %289 = vmatprep.subr.mxu0 0.0
  %290 = vmatpush2.msra.mxu0 0.0
  %291 = vmatprep.subr.mxu0 0.0
  %292 = vmatpush2.msra.mxu0 0.0
  %293 = vmatprep.mubr.f32.mxu0 0.0
  %294 = vmatmul.mubr.f32.gmra.mxu0 %v20
  %v295 = vpop.f32.mrf.mxu0
  %v296 = vadd.f32 %v151, %v295
  %v297 = vpop.f32.mrf.mxu0
  %298 = vmatprep.mubr.f32.mxu0 0.0
  %299 = vmatmul.mubr.f32.gmra.mxu0 %v21
  %v300 = vpop.f32.mrf.mxu0
  %v301 = vadd.f32 %v156, %v300
  %v302 = vpop.f32.mrf.mxu0
  %303 = vmatprep.mubr.f32.mxu0 0.0
  %304 = vmatmul.mubr.f32.gmra.mxu0 %v22
  %v305 = vpop.f32.mrf.mxu0
  %v306 = vadd.f32 %v161, %v305
  %v307 = vpop.f32.mrf.mxu0
  %308 = vmatprep.mubr.f32.mxu0 0.0
  %309 = vmatmul.mubr.f32.gmra.mxu0 %v23
  %v310 = vpop.f32.mrf.mxu0
  %v311 = vadd.f32 %v166, %v310
  %v312 = vpop.f32.mrf.mxu0
  %313 = vmatprep.mubr.f32.mxu0 0.0
  %314 = vmatmul.mubr.f32.gmra.mxu0 %v24
  %v315 = vpop.f32.mrf.mxu0
  %v316 = vadd.f32 %v171, %v315
  %v317 = vpop.f32.mrf.mxu0
  %318 = vmatprep.mubr.f32.mxu0 0.0
  %319 = vmatmul.mubr.f32.gmra.mxu0 %v25
  %v320 = vpop.f32.mrf.mxu0
  %v321 = vadd.f32 %v176, %v320
  %v322 = vpop.f32.mrf.mxu0
  %323 = vmatprep.mubr.f32.mxu0 0.0
  %324 = vmatmul.mubr.f32.gmra.mxu0 %v26
  %v325 = vpop.f32.mrf.mxu0
  %v326 = vadd.f32 %v181, %v325
  %v327 = vpop.f32.mrf.mxu0
  %328 = vmatprep.mubr.f32.mxu0 0.0
  %329 = vmatmul.mubr.f32.gmra.mxu0 %v27
  %v330 = vpop.f32.mrf.mxu0
  %v331 = vadd.f32 %v186, %v330
  %v332 = vpop.f32.mrf.mxu0
  %333 = vmatprep.mubr.f32.mxu0 0.0
  %334 = vmatmul.mubr.f32.gmra.mxu0 %v28
  %v335 = vpop.f32.mrf.mxu0
  %v336 = vadd.f32 %v191, %v335
  %v337 = vpop.f32.mrf.mxu0
  %338 = vmatprep.mubr.f32.mxu0 0.0
  %339 = vmatmul.mubr.f32.gmra.mxu0 %v29
  %v340 = vpop.f32.mrf.mxu0
  %v341 = vadd.f32 %v196, %v340
  %v342 = vpop.f32.mrf.mxu0
  %343 = vmatprep.mubr.f32.mxu0 0.0
  %344 = vmatmul.mubr.f32.gmra.mxu0 %v30
  %v345 = vpop.f32.mrf.mxu0
  %v346 = vadd.f32 %v201, %v345
  %v347 = vpop.f32.mrf.mxu0
  %348 = vmatprep.mubr.f32.mxu0 0.0
  %349 = vmatmul.mubr.f32.gmra.mxu0 %v31
  %v350 = vpop.f32.mrf.mxu0
  %v351 = vadd.f32 %v206, %v350
  %v352 = vpop.f32.mrf.mxu0
  %353 = vmatprep.mubr.f32.mxu0 0.0
  %354 = vmatmul.mubr.f32.gmra.mxu0 %v32
  %v355 = vpop.f32.mrf.mxu0
  %v356 = vadd.f32 %v211, %v355
  %v357 = vpop.f32.mrf.mxu0
  %358 = vmatprep.mubr.f32.mxu0 0.0
  %359 = vmatmul.mubr.f32.gmra.mxu0 %v33
  %v360 = vpop.f32.mrf.mxu0
  %v361 = vadd.f32 %v216, %v360
  %v362 = vpop.f32.mrf.mxu0
  %363 = vmatprep.mubr.f32.mxu0 0.0
  %364 = vmatmul.mubr.f32.gmra.mxu0 %v34
  %v365 = vpop.f32.mrf.mxu0
  %v366 = vadd.f32 %v221, %v365
  %v367 = vpop.f32.mrf.mxu0
  %368 = vmatprep.mubr.f32.mxu0 0.0
  %369 = vmatmul.mubr.f32.gmra.mxu0 %v35
  %v370 = vpop.f32.mrf.mxu0
  %v371 = vadd.f32 %v226, %v370
  %v372 = vpop.f32.mrf.mxu0
  %373 = vdwg.mxu0
  %374 = vst [vmem:[%s4] sm:$0xff] %v296
  %375 = vst [vmem:[%s4 + $0x8] sm:$0xff] %v301
  %376 = vst [vmem:[%s4 + $0x10] sm:$0xff] %v306
  %377 = vst [vmem:[%s4 + $0x18] sm:$0xff] %v311
  %378 = vst [vmem:[%s4 + $0x20] sm:$0xff] %v316
  %379 = vst [vmem:[%s4 + $0x28] sm:$0xff] %v321
  %380 = vst [vmem:[%s4 + $0x30] sm:$0xff] %v326
  %381 = vst [vmem:[%s4 + $0x38] sm:$0xff] %v331
  %382 = vst [vmem:[%s4 + $0x40] sm:$0xff] %v336
  %383 = vst [vmem:[%s4 + $0x48] sm:$0xff] %v341
  %384 = vst [vmem:[%s4 + $0x50] sm:$0xff] %v346
  %385 = vst [vmem:[%s4 + $0x58] sm:$0xff] %v351
  %386 = vst [vmem:[%s4 + $0x60] sm:$0xff] %v356
  %387 = vst [vmem:[%s4 + $0x68] sm:$0xff] %v361
  %388 = vst [vmem:[%s4 + $0x70] sm:$0xff] %v366
  %389 = vst [vmem:[%s4 + $0x78] sm:$0xff] %v371
  %v390 = vadd.f32 %v296, %v301
  %v391 = vadd.f32 %v390, %v306
  %v392 = vadd.f32 %v391, %v311
  %v393 = vadd.f32 %v392, %v316
  %v394 = vadd.f32 %v393, %v321
  %v395 = vadd.f32 %v394, %v326
  %v396 = vadd.f32 %v395, %v331
  %v397 = vadd.f32 %v396, %v336
  %v398 = vadd.f32 %v397, %v341
  %v399 = vadd.f32 %v398, %v346
  %v400 = vadd.f32 %v399, %v351
  %v401 = vadd.f32 %v400, %v356
  %v402 = vadd.f32 %v401, %v361
  %v403 = vadd.f32 %v402, %v366
  %v404 = vadd.f32 %v403, %v371
  %v405 = vrot.slane %v404, 4
  %v406 = vadd.f32 %v404, %v405
  %v407 = vrot.slane %v406, 2
  %v408 = vadd.f32 %v406, %v407
  %v409 = vrot.slane %v408, 1
  %v410 = vadd.f32 %v408, %v409
  %411 = vst [vmem:[%s5] sm:$0xff] %v410
  %v412 = vmul.f32 %v296, %v296
  %v413 = vmul.f32 %v301, %v301
  %v414 = vmul.f32 %v306, %v306
  %v415 = vmul.f32 %v311, %v311
  %v416 = vmul.f32 %v316, %v316
  %v417 = vmul.f32 %v321, %v321
  %v418 = vmul.f32 %v326, %v326
  %v419 = vmul.f32 %v331, %v331
  %v420 = vmul.f32 %v336, %v336
  %v421 = vmul.f32 %v341, %v341
  %v422 = vmul.f32 %v346, %v346
  %v423 = vmul.f32 %v351, %v351
  %v424 = vmul.f32 %v356, %v356
  %v425 = vmul.f32 %v361, %v361
  %v426 = vmul.f32 %v366, %v366
  %v427 = vmul.f32 %v371, %v371
  %v428 = vadd.f32 %v412, %v413
  %v429 = vadd.f32 %v428, %v414
  %v430 = vadd.f32 %v429, %v415
  %v431 = vadd.f32 %v430, %v416
  %v432 = vadd.f32 %v431, %v417
  %v433 = vadd.f32 %v432, %v418
  %v434 = vadd.f32 %v433, %v419
  %v435 = vadd.f32 %v434, %v420
  %v436 = vadd.f32 %v435, %v421
  %v437 = vadd.f32 %v436, %v422
  %v438 = vadd.f32 %v437, %v423
  %v439 = vadd.f32 %v438, %v424
  %v440 = vadd.f32 %v439, %v425
  %v441 = vadd.f32 %v440, %v426
  %v442 = vadd.f32 %v441, %v427
  %v443 = vrot.slane %v442, 4
  %v444 = vadd.f32 %v442, %v443
  %v445 = vrot.slane %v444, 2
  %v446 = vadd.f32 %v444, %v445
  %v447 = vrot.slane %v446, 1
  %v448 = vadd.f32 %v446, %v447
  %449 = vst [vmem:[%s6] sm:$0xff] %v448
  // Predicated region
  $region18: #{basic_block_forward.6} parent=0 // pred_check
    _
  $region19: #{basic_block_forward.6} parent=0 // pred_check_branch
    %451 = sbr.rel (0) target = $region21
  $region20: #{basic_block_forward.6} parent=0 // pred_region
    _
  $region21: #{basic_block_forward.6} parent=0 // pred_fallthru
    _
  // Predicated region
  $region22: #{basic_block_forward.6} parent=0 // pred_check
    _
  $region23: #{basic_block_forward.6} parent=0 // pred_check_branch
    %453 = sbr.rel (0) target = $region25
  $region24: #{basic_block_forward.6} parent=0 // pred_region
    _
  $region25: #{basic_block_forward.6} parent=0 // pred_fallthru
    _
  // Predicated region
  $region26: #{basic_block_forward.6} parent=0 // pred_check
    _
  $region27: #{basic_block_forward.6} parent=0 // pred_check_branch
    %455 = sbr.rel (0) target = $region29
  $region28: #{basic_block_forward.6} parent=0 // pred_region
    _
  $region29: #{basic_block_forward.6} parent=0 // pred_fallthru
    _
  // Predicated region
  $region30: #{basic_block_forward.6} parent=0 // pred_check
    _
  $region31: #{basic_block_forward.6} parent=0 // pred_check_branch
    %457 = sbr.rel (0) target = $region33
  $region32: #{basic_block_forward.6} parent=0 // pred_region
    _
  $region33: #{basic_block_forward.6} parent=0 // pred_fallthru
    _
  // Predicated region
  $region34: #{basic_block_forward.6} parent=0 // pred_check
    _
  $region35: #{basic_block_forward.6} parent=0 // pred_check_branch
    %459 = sbr.rel (0) target = $region37
  $region36: #{basic_block_forward.6} parent=0 // pred_region
    _
  $region37: #{basic_block_forward.6} parent=0 // pred_fallthru
    _
  // Predicated region
  $region38: #{basic_block_forward.6} parent=0 // pred_check
    _
  $region39: #{basic_block_forward.6} parent=0 // pred_check_branch
    %461 = sbr.rel (0) target = $region41
  $region40: #{basic_block_forward.6} parent=0 // pred_region
    _
  $region41: #{basic_block_forward.6} parent=0 // pred_fallthru
    _

</llo_original>
